<compile_context>
chip_gen: v7x
topology: tpu7x:2x2x1
jax: 0.10.0
libtpu: 0.0.40
codegen_flags: <defaults>
</compile_context>

<pallas_src>
import jax
import jax.numpy as jnp
from jax import lax
from jax.experimental import pallas as pl
from jax.experimental.pallas import tpu as pltpu


def _round_up(x, m):
    return ((x + m - 1) // m) * m


# --------------------------------------------------------------------------------------
# Small lane-dense projection matmul: out[:, cols] = lhs @ rhs[:, cols], column-tiled grid.
# Used for both the B-projection and the C-projection (whole batch in one wide matmul).
# --------------------------------------------------------------------------------------
def _proj_cols_kernel(lhs_ref, rhs_ref, out_ref):
    out_ref[...] = jnp.dot(lhs_ref[...], rhs_ref[...],
                           preferred_element_type=jnp.float32)


def _tiled_colwise_matmul(lhs, rhs, *, col_tile=1024):
    m, k = lhs.shape
    k2, ncols = rhs.shape
    assert k == k2
    # ncols = bszp * L_pad is always a multiple of 8*128 = 1024 by construction.
    col_tile = min(col_tile, ncols)
    assert ncols % col_tile == 0
    return pl.pallas_call(
        _proj_cols_kernel,
        grid=(ncols // col_tile,),
        out_shape=jax.ShapeDtypeStruct((m, ncols), jnp.float32),
        in_specs=[pl.BlockSpec((m, k), lambda j: (0, 0)),
                  pl.BlockSpec((k, col_tile), lambda j: (0, j))],
        out_specs=pl.BlockSpec((m, col_tile), lambda j: (0, j)),
        compiler_params=pltpu.CompilerParams(dimension_semantics=("parallel",)),
    )(lhs, rhs)


# --------------------------------------------------------------------------------------
# Fused kernel: per (channel block, l-row tile) build the causal-Toeplitz block of the SSM
# kernel from its rank-2S separable form and apply it to all batch columns on the MXU.
#   y[n, b, r] = sum_{t <= l} K[n, l - t] * xh[n, b, t],   l = lt*TL + r
# Grid = (num_nb, num_lt): lt is innermost so xh / pole params stay VMEM-resident per nb.
# --------------------------------------------------------------------------------------
def _toeplitz_conv_kernel(ar_ref, ai_ref, e_ref, xh_ref, y_ref):
    nb_sz, s_sz = ar_ref.shape
    l_pad = xh_ref.shape[-1]
    tl = y_ref.shape[-1]
    f32 = jnp.float32

    lt = pl.program_id(1)                    # l-tile index (innermost grid axis)
    row0_i = lt * tl                         # first global row (l) of this tile
    row0 = row0_i.astype(f32)

    ar = ar_ref[...][:, None, :]             # (NB, 1, S)
    ai = ai_ref[...][:, None, :]
    ee = e_ref[...][:, None, :]

    # Rank-2S separable factors.  With l - t = r + (row0 - t):
    #   exp(a(l-t)) = exp(a*r) * exp(a*(row0-t))
    #   cos(w(l-t)) = cos(w*r)cos(w*(row0-t)) - sin(w*r)sin(w*(row0-t))
    # Row-side factors at local rows r = 0..TL-1, layout (NB, TL, S).
    rr = lax.broadcasted_iota(f32, (nb_sz, tl, s_sz), 1)
    pr = jnp.exp(ar * rr)
    row_cos = pr * jnp.cos(ai * rr)
    row_sin = pr * jnp.sin(ai * rr)

    # Column-side factors at absolute t = 0..L_pad-1, layout (NB, L_pad, S).
    tc = lax.broadcasted_iota(f32, (nb_sz, l_pad, s_sz), 1)
    dcol = row0 - tc
    # Clamp the exp argument: causal entries need at most |a|*TL (+ a*row0 for growing
    # poles); acausal entries are zeroed by the mask below, the clamp only keeps them
    # finite so the mask multiply cannot produce inf * 0 = NaN.
    aarg = jnp.minimum(ar * dcol, jnp.abs(ar) * tl + jnp.maximum(ar, 0.0) * row0)
    pc = ee * jnp.exp(aarg)
    col_cos = pc * jnp.cos(ai * dcol)
    col_sin = pc * jnp.sin(ai * dcol)

    # Toeplitz block on the MXU:  T[n, t, r] = sum_s col_cos*row_cos - col_sin*row_sin
    dn = (((2,), (2,)), ((0,), (0,)))        # 'nts,nrs->ntr' : contract s, batch over n
    tblk = lax.dot_general(col_cos, row_cos, dn, preferred_element_type=f32)
    tblk = tblk - lax.dot_general(col_sin, row_sin, dn, preferred_element_type=f32)

    # Causal mask: keep t <= l = row0 + r.
    t_idx = lax.broadcasted_iota(jnp.int32, (l_pad, tl), 0)
    l_idx = lax.broadcasted_iota(jnp.int32, (l_pad, tl), 1) + row0_i
    tblk = tblk * (t_idx <= l_idx).astype(f32)[None]

    # Depthwise causal conv as a batched MXU matmul, all batch elements as RHS columns:
    #   y[n, b, r] = sum_t xh[n, b, t] * T[n, t, r]          ('nbt,ntr->nbr')
    y_ref[...] = lax.dot_general(
        xh_ref[...], tblk,
        dimension_numbers=(((2,), (1,)), ((0,), (0,))),
        preferred_element_type=f32)


# --------------------------------------------------------------------------------------
# Wrapper: pad/align, B-projection, fused Toeplitz+conv, C-projection, un-pad.
# --------------------------------------------------------------------------------------
def padded_fft_conv_inference(inp, dtA_real, dtA_imag, B, C, E, *, tile_l=128, n_block=8):
    """inp: (batch, C_in, L); dtA_*/E: (N, S); B: (N, C_in); C: (D, N) -> (batch, D, L)."""
    # TODO(synk): the PyTorch module caches self.K across calls; this wrapper is stateless
    # and rebuilds the (tiny, O(N*S*(L+TL))) rank-2S factors inside the kernel every call.
    f32 = jnp.float32
    inp = inp.astype(f32)
    dtA_real = dtA_real.astype(f32)
    dtA_imag = dtA_imag.astype(f32)
    B = B.astype(f32)
    C = C.astype(f32)
    E = E.astype(f32)

    bsz, c_in, L = inp.shape
    N, S = dtA_real.shape
    D = C.shape[0]

    assert tile_l % 128 == 0 and n_block % 8 == 0

    L_pad = _round_up(L, tile_l)
    bszp = _round_up(bsz, 8)
    c_pad = _round_up(c_in, 8)
    n_pad = _round_up(N, n_block)
    d_pad = _round_up(D, 8)
    s_pad = _round_up(S, 8)

    # Zero padding; padded channels/poles have E == 0 so they contribute nothing.
    inp_p = jnp.zeros((bszp, c_pad, L_pad), f32).at[:bsz, :c_in, :L].set(inp)
    b_p = jnp.zeros((n_pad, c_pad), f32).at[:N, :c_in].set(B)
    c_p = jnp.zeros((d_pad, n_pad), f32).at[:D, :N].set(C)
    ar_p = jnp.zeros((n_pad, s_pad), f32).at[:N, :S].set(dtA_real)
    ai_p = jnp.zeros((n_pad, s_pad), f32).at[:N, :S].set(dtA_imag)
    e_p = jnp.zeros((n_pad, s_pad), f32).at[:N, :S].set(E)

    num_lt = L_pad // tile_l
    num_nb = n_pad // n_block

    # ---- 1. B-projection for the whole batch: xh[n, b, t] = sum_c B[n, c] * inp[b, c, t]
    #         (one lane-dense (N, C) @ (C, bsz*L) matmul instead of per-batch matvecs)
    inp_2d = jnp.transpose(inp_p, (1, 0, 2)).reshape(c_pad, bszp * L_pad)
    xh = _tiled_colwise_matmul(b_p, inp_2d).reshape(n_pad, bszp, L_pad)

    # ---- 2. fused Toeplitz construction + depthwise causal conv (T never touches HBM)
    steps = num_lt * num_nb
    flops_per_step = (2 * 2 * n_block * L_pad * tile_l * s_pad     # rank-2S build (MXU)
                      + 2 * n_block * bszp * L_pad * tile_l)       # conv (MXU)
    cost = pl.CostEstimate(
        flops=int(steps * flops_per_step),
        transcendentals=int(steps * 3 * n_block * s_pad * (L_pad + tile_l)),
        bytes_accessed=int(4 * (num_nb * n_block * bszp * L_pad   # xh loaded once per nb
                                + n_pad * bszp * L_pad            # y written once
                                + 3 * n_pad * s_pad)),
    )
    y = pl.pallas_call(
        _toeplitz_conv_kernel,
        grid=(num_nb, num_lt),                          # lt innermost -> xh stays resident
        out_shape=jax.ShapeDtypeStruct((n_pad, bszp, L_pad), f32),
        in_specs=[
            pl.BlockSpec((n_block, s_pad), lambda nb, lt: (nb, 0)),
            pl.BlockSpec((n_block, s_pad), lambda nb, lt: (nb, 0)),
            pl.BlockSpec((n_block, s_pad), lambda nb, lt: (nb, 0)),
            pl.BlockSpec((n_block, bszp, L_pad), lambda nb, lt: (nb, 0, 0)),
        ],
        out_specs=pl.BlockSpec((n_block, bszp, tile_l), lambda nb, lt: (nb, 0, lt)),
        compiler_params=pltpu.CompilerParams(
            dimension_semantics=("parallel", "parallel"),
            vmem_limit_bytes=32 * 1024 * 1024,
        ),
        cost_estimate=cost,
    )(ar_p, ai_p, e_p, xh)

    # ---- 3. C-projection: out[d, b, l] = sum_n C[d, n] * y[n, b, l]  (one wide matmul)
    out_2d = _tiled_colwise_matmul(c_p, y.reshape(n_pad, bszp * L_pad))
    out = out_2d.reshape(d_pad, bszp, L_pad).transpose(1, 0, 2)[:bsz, :D, :L]
    return out


# --------------------------------------------------------------------------------------
# Plain-JAX replica of the PyTorch forward (FFT path) for numerical verification.
# --------------------------------------------------------------------------------------
def _reference(inp, ar, ai, B, C, E):
    hi = jax.lax.Precision.HIGHEST
    L = inp.shape[-1]
    l = jnp.arange(L, dtype=jnp.float32)
    K = jnp.sum(jnp.exp(ar[..., None] * l) * jnp.cos(ai[..., None] * l) * E[..., None],
                axis=-2)
    x = jnp.einsum('bcl,nc->bnl', inp, B, precision=hi)
    uf = jnp.fft.rfft(x, 2 * L)
    kf = jnp.fft.rfft(K, 2 * L)
    y = jnp.fft.irfft(uf * kf, 2 * L)[..., :L]
    return jnp.einsum('bnl,dn->bdl', y, C, precision=hi)


if __name__ == "__main__":
    key = jax.random.PRNGKey(0)
    k1, k2, k3, k4, k5, k6 = jax.random.split(key, 6)

    bsz, c_in, L = 2, 4, 150     # batch, input channels, sequence length (not 128-aligned)
    N, S, D = 12, 3, 5           # SSM channels, poles per channel, output channels

    inp = jax.random.normal(k1, (bsz, c_in, L), jnp.float32)
    dtA_real = -jnp.abs(jax.random.normal(k2, (N, S), jnp.float32)) * 0.1   # decaying modes
    dtA_imag = jax.random.normal(k3, (N, S), jnp.float32) * 0.5
    Bp = jax.random.normal(k4, (N, c_in), jnp.float32) * 0.3
    Cp = jax.random.normal(k5, (D, N), jnp.float32) * 0.3
    E = jax.random.normal(k6, (N, S), jnp.float32) * 0.3

    out = padded_fft_conv_inference(inp, dtA_real, dtA_imag, Bp, Cp, E)
    out = jax.block_until_ready(out)
    assert out.shape == (bsz, D, L)

    ref = _reference(inp, dtA_real, dtA_imag, Bp, Cp, E)
    err = float(jnp.max(jnp.abs(out - ref)))
    if not jnp.allclose(out, ref, rtol=5e-3, atol=5e-3):
        raise AssertionError(f"Pallas result mismatch vs FFT reference, max abs err = {err}")

    print("KERNEL_OK")
</pallas_src>

<mosaic_0001>
module attributes {stable_mosaic.version = 11 : i64} {
  func.func @_proj_cols_kernel(%arg0: i32, %arg1: memref<16x8xf32, #tpu.memory_space<vmem>>, %arg2: memref<8x1024xf32, #tpu.memory_space<vmem>>, %arg3: memref<16x1024xf32, #tpu.memory_space<vmem>>) attributes {dimension_semantics = [#tpu.dimension_semantics<parallel>], iteration_bounds = array<i64: 2>, scalar_prefetch = 0 : i64, scratch_operands = 0 : i64, tpu.core_type = #tpu.core_type<tc>, window_params = [{pipeline_mode = #tpu.pipeline_mode<synchronous>, transform_indices = @transform_0, window_bounds = array<i64: 16, 8>}, {transform_indices = @transform_1, window_bounds = array<i64: 8, 1024>}, {transform_indices = @transform_2, window_bounds = array<i64: 16, 1024>}]} {
    %c0 = arith.constant 0 : index
    %c0_0 = arith.constant 0 : index
    %0 = vector.load %arg1[%c0, %c0_0] : memref<16x8xf32, #tpu.memory_space<vmem>>, vector<16x8xf32>
    %c0_1 = arith.constant 0 : index
    %c0_2 = arith.constant 0 : index
    %1 = vector.load %arg2[%c0_1, %c0_2] : memref<8x1024xf32, #tpu.memory_space<vmem>>, vector<8x1024xf32>
    %cst = arith.constant dense<0.000000e+00> : vector<16x1024xf32>
    %2 = tpu.matmul %0, %1, %cst {dimension_numbers = #tpu.dot_dimension_numbers<[1], [0], [0], [1], [0, 0, 1, 1], [], []>} : vector<16x8xf32>, vector<8x1024xf32>, vector<16x1024xf32> -> vector<16x1024xf32>
    %c0_3 = arith.constant 0 : index
    %c0_4 = arith.constant 0 : index
    %3 = vector.load %arg3[%c0_3, %c0_4] : memref<16x1024xf32, #tpu.memory_space<vmem>>, vector<16x1024xf32>
    tpu.vector_store %arg3[%c0_3, %c0_4], %2 {strides = array<i32>} : memref<16x1024xf32, #tpu.memory_space<vmem>>, vector<16x1024xf32>,
    return
  }
  func.func @transform_0(%arg0: i32) -> (i32, i32) {
    %c0_i32 = arith.constant 0 : i32
    %c0_i32_0 = arith.constant 0 : i32
    %c0_i32_1 = arith.constant 0 : i32
    return %c0_i32, %c0_i32_0 : i32, i32
  }
  func.func @transform_1(%arg0: i32) -> (i32, i32) {
    %c0_i32 = arith.constant 0 : i32
    %c0_i32_0 = arith.constant 0 : i32
    return %c0_i32, %arg0 : i32, i32
  }
  func.func @transform_2(%arg0: i32) -> (i32, i32) {
    %c0_i32 = arith.constant 0 : i32
    %c0_i32_0 = arith.constant 0 : i32
    return %c0_i32, %arg0 : i32, i32
  }
}

</mosaic_0001>

<llo_original>
// kernel: tpu_custom_call.1
$region0: #{tpu_custom_call.1}
  #allocation0 [shape = 'u32[]', space=smem, size = 0x4, offset = 0x4, fixed_abs, tag = 'smem constant byte address 0x4 - core index']
  #allocation1 [shape = 'u32[144,128]{1,0:T(1,128)}', space=vmem, size = 0x12000, scoped, tag = 'internal scratch']
  %s0 = inlined_call_operand.vmem [shape: f32[16,8], index: 0, kind: input, shape index: {}]
  %s1 = inlined_call_operand.hbm [shape: f32[8,2048], index: 1, kind: input, shape index: {}]
  %s2 = inlined_call_operand.hbm [shape: f32[16,2048], index: 2, kind: output, shape index: {}]
  %s3 = sld [smem:[#allocation0]]
  $region45: #{tpu_custom_call.1} parent=0
    _
  %s5 = ssub.s32 1, %s3
  %s6 = scalar_select 0, %s5, %s3
  $region1: #{tpu_custom_call.1} parent=0
    #allocation2 [shape = 'u8[65536]{0}', space=vmem, size = 0x10000, scoped, tag = 'input window, operand 1']
    #allocation3 [shape = 's32[2]{0}', space=sflag, size = 0x8, scoped, tag = 'scoped memory for tpu_custom_call.1']
    #allocation4 [shape = 's32[2]{0}', space=sflag, size = 0x8, scoped, tag = 'scoped memory for tpu_custom_call.1']
    #allocation5 [shape = 'u8[131072]{0}', space=vmem, size = 0x20000, scoped, tag = 'output window, operand 0']
    %7 = vsyncpa [#allocation3], 0
    %s8 = scalar_lea.sflag [#allocation3], 1
    %9 = vsyncpa %s8, 0
    %10 = vsyncpa [#allocation4], 0
    %s11 = scalar_lea.sflag [#allocation4], 1
    %12 = vsyncpa %s11, 0
    loop: start=0, step=1, limit=4
    $region2: #{tpu_custom_call.1} parent=1 // loop_pre_header
      _
    $region3: #{tpu_custom_call.1} parent=1 // loop_header
      %s14 = sphi 0, %s18
      %p15 = scmp.ge.s32.totalorder %s14, 4
      %s22 = sphi 0, %s22
      %s24 = sphi 0, %s22
      %s25 = sphi 0, %s24
      %s39 = sphi 0, %s25
      %s45 = sphi 0, %s47
      %s48 = sphi 0, %s45
      %s49 = sphi 0, %s48
      %s65 = sphi 0, %s49
      %s71 = sphi 0, %s73
      %s74 = sphi 0, %s71
      %s75 = sphi 0, %s74
      %s91 = sphi 0, %s75
    $region4: #{tpu_custom_call.1} parent=1 // loop_header_branch
      %17 = sbr.rel (%p15) target = $region8
    $region5: #{tpu_custom_call.1} parent=1 // loop_body
      %s19 = ssub.s32 %s14, 1
      %s20 = ssub.s32 %s14, 2
      %s21 = sadd.s32 %s14, 1
      %s23 = sadd.s32 %s22, 1
      %p26 = scmp.eq.s32.totalorder %s14, 1
      %p27 = scmp.ne.s32.totalorder %s22, %s24
      %p28 = scmp.eq.s32.totalorder %s14, 0
      %p29 = por %p27, %p28
      %p30 = scmp.ne.s32.totalorder %s22, %s24
      %p31 = scmp.eq.s32.totalorder %s19, 1
      %p32 = por %p30, %p31
      %p33 = scmp.ne.s32.totalorder %s24, %s25
      %p34 = scmp.eq.s32.totalorder %s19, 0
      %p35 = por %p33, %p34
      %p36 = scmp.ne.s32.totalorder %s24, %s25
      %p37 = scmp.eq.s32.totalorder %s20, 1
      %p38 = por %p36, %p37
      %p40 = scmp.ne.s32.totalorder %s25, %s39
      %p41 = scmp.eq.s32.totalorder %s20, 0
      %p42 = por %p40, %p41
      %s43 = ssub.s32 %s14, %s21
      %p44 = scmp.eq.s32.totalorder %s43, 0
      %s46 = sadd.s32 %s45, 1
      %s47 = scalar_select %p44, %s45, %s46
      %p50 = pneg %p44
      %p51 = scmp.eq.s32.totalorder %s14, 1
      %p52 = por %p50, %p51
      %p53 = scmp.ne.s32.totalorder %s45, %s48
      %p54 = scmp.eq.s32.totalorder %s14, 0
      %p55 = por %p53, %p54
      %p56 = scmp.ne.s32.totalorder %s45, %s48
      %p57 = scmp.eq.s32.totalorder %s19, 1
      %p58 = por %p56, %p57
      %p59 = scmp.ne.s32.totalorder %s48, %s49
      %p60 = scmp.eq.s32.totalorder %s19, 0
      %p61 = por %p59, %p60
      %p62 = scmp.ne.s32.totalorder %s48, %s49
      %p63 = scmp.eq.s32.totalorder %s20, 1
      %p64 = por %p62, %p63
      %p66 = scmp.ne.s32.totalorder %s49, %s65
      %p67 = scmp.eq.s32.totalorder %s20, 0
      %p68 = por %p66, %p67
      %s69 = ssub.s32 %s14, %s21
      %p70 = scmp.eq.s32.totalorder %s69, 0
      %s72 = sadd.s32 %s71, 1
      %s73 = scalar_select %p70, %s71, %s72
      %p76 = pneg %p70
      %p77 = scmp.eq.s32.totalorder %s14, 1
      %p78 = por %p76, %p77
      %p79 = scmp.ne.s32.totalorder %s71, %s74
      %p80 = scmp.eq.s32.totalorder %s14, 0
      %p81 = por %p79, %p80
      %p82 = scmp.ne.s32.totalorder %s71, %s74
      %p83 = scmp.eq.s32.totalorder %s19, 1
      %p84 = por %p82, %p83
      %p85 = scmp.ne.s32.totalorder %s74, %s75
      %p86 = scmp.eq.s32.totalorder %s19, 0
      %p87 = por %p85, %p86
      %p88 = scmp.ne.s32.totalorder %s74, %s75
      %p89 = scmp.eq.s32.totalorder %s20, 1
      %p90 = por %p88, %p89
      %p92 = scmp.ne.s32.totalorder %s75, %s91
      %p93 = scmp.eq.s32.totalorder %s20, 0
      %p94 = por %p92, %p93
      %p95 = scmp.le.s32.totalorder 1, %s14
      %p96 = scmp.lt.s32.totalorder %s14, 3
      %p97 = pnand %p95, %p96
      %p98 = pneg %p97
      // Predicated region
      $region9: #{tpu_custom_call.1} parent=5 // pred_check
        _
      $region10: #{tpu_custom_call.1} parent=5 // pred_check_branch
        %100 = sbr.rel (%p97) target = $region12
      $region11: #{tpu_custom_call.1} parent=5 // pred_region
        %s101 = ssub.s32 %s14, 1
        // Predicated region
        $region13: #{tpu_custom_call.1} parent=11 // pred_check
          %p102 = pneg %p35
        $region14: #{tpu_custom_call.1} parent=11 // pred_check_branch
          %104 = sbr.rel (%p102) target = $region16
        $region15: #{tpu_custom_call.1} parent=11 // pred_region
          _
        $region16: #{tpu_custom_call.1} parent=11 // pred_fallthru
          _
      $region12: #{tpu_custom_call.1} parent=5 // pred_fallthru
        _
      %p105 = scmp.lt.s32.totalorder %s14, 2
      // Predicated region
      $region17: #{tpu_custom_call.1} parent=5 // pred_check
        %p106 = pneg %p105
      $region18: #{tpu_custom_call.1} parent=5 // pred_check_branch
        %108 = sbr.rel (%p106) target = $region20
      $region19: #{tpu_custom_call.1} parent=5 // pred_region
        // Predicated region
        $region21: #{tpu_custom_call.1} parent=19 // pred_check
          %p109 = pneg %p55
        $region22: #{tpu_custom_call.1} parent=19 // pred_check_branch
          %111 = sbr.rel (%p109) target = $region24
        $region23: #{tpu_custom_call.1} parent=19 // pred_region
          %s112 = sand.u32 %s45, 1
          %s113 = scalar_lea.sflag [#allocation3], %s112
          %s114 = sand.u32 %s45, 1
          %s115 = smul.addr %s114, 64
          %s116 = scalar_lea.vmem [#allocation2], %s115
          %s117 = smul.u32 8, %s14
          %s119 = ssub.s32 1024, 1024
          %120 = vsyncadd %s113, %s119
          %s121 = smul.addr %s117, 128
          %s122 = scalar_lea.hbm %s1, %s121
          %s124 = sshll.u32 %s116, 4
          %s125 = int_to_ptr.vmem [resolvable:$true] %s124
          %127 = dma.hbm_to_vmem [thread:$0]  %s122, 1024, %s125, %s113
        $region24: #{tpu_custom_call.1} parent=19 // pred_fallthru
          _
      $region20: #{tpu_custom_call.1} parent=5 // pred_fallthru
        _
      %p128 = scmp.le.s32.totalorder 1, %s14
      %p129 = scmp.lt.s32.totalorder %s14, 3
      %p130 = pnand %p128, %p129
      %p131 = pneg %p130
      // Predicated region
      $region25: #{tpu_custom_call.1} parent=5 // pred_check
        _
      $region26: #{tpu_custom_call.1} parent=5 // pred_check_branch
        %133 = sbr.rel (%p130) target = $region28
      $region27: #{tpu_custom_call.1} parent=5 // pred_region
        %s134 = ssub.s32 %s14, 1
        %s135 = sand.u32 %s48, 1
        %s136 = scalar_lea.sflag [#allocation3], %s135
        %s137 = sand.u32 %s48, 1
        %s138 = smul.addr %s137, 64
        %s139 = scalar_lea.vmem [#allocation2], %s138
        // Predicated region
        $region29: #{tpu_custom_call.1} parent=27 // pred_check
          %p140 = pneg %p61
        $region30: #{tpu_custom_call.1} parent=27 // pred_check_branch
          %142 = sbr.rel (%p140) target = $region32
        $region31: #{tpu_custom_call.1} parent=27 // pred_region
          %143 = dma.done %s136, 1024
        $region32: #{tpu_custom_call.1} parent=27 // pred_fallthru
          _
        %p144 = pneg %p35
        %p145 = pneg %p32
        %s146 = sand.u32 %s48, 1
        %s147 = scalar_lea.sflag [#allocation3], %s146
        %s148 = sand.u32 %s48, 1
        %s149 = smul.addr %s148, 64
        %s150 = scalar_lea.vmem [#allocation2], %s149
        %p151 = pneg %p61
        %p152 = pneg %p58
        %p153 = pneg %p87
        %p154 = pneg %p84
        %s155 = sand.u32 %s74, 1
        %s156 = scalar_lea.sflag [#allocation4], %s155
        %s157 = sand.u32 %s74, 1
        %s158 = smul.addr %s157, 128
        %s159 = scalar_lea.vmem [#allocation5], %s158
        %s160 = smul.u32 8, %s19
        %s161 = smul.u32 8, %s19
        %v162 = vld [vmem:[%s0] sm:$0xff]
        %v163 = vld [vmem:[%s0 + $0x8] sm:$0xff]
        %v164 = vld [vmem:[%s139] sm:$0xff]
        %v165 = vld [vmem:[%s139 + $0x8] sm:$0xff]
        %v166 = vld [vmem:[%s139 + $0x10] sm:$0xff]
        %v167 = vld [vmem:[%s139 + $0x18] sm:$0xff]
        %v168 = vld [vmem:[%s139 + $0x20] sm:$0xff]
        %v169 = vld [vmem:[%s139 + $0x28] sm:$0xff]
        %v170 = vld [vmem:[%s139 + $0x30] sm:$0xff]
        %v171 = vld [vmem:[%s139 + $0x38] sm:$0xff]
        %vm172 = vcmask 64512
        %v174 = vsel %vm172, %v162, 0
        %v177 = vsel %vm172, %v163, 0
        %179 = vmatprep.subr.mxu0 %v165
        %180 = vmatpush1.msra.mxu0 %v164
        %181 = vmatprep.subr.mxu0 0.0
        %182 = vmatpush1.msra.mxu0 0.0
        %183 = vmatprep.subr.mxu0 0.0
        %184 = vmatpush1.msra.mxu0 0.0
        %185 = vmatprep.subr.mxu0 0.0
        %186 = vmatpush1.msra.mxu0 0.0
        %187 = vmatprep.subr.mxu0 0.0
        %188 = vmatpush1.msra.mxu0 0.0
        %189 = vmatprep.subr.mxu0 0.0
        %190 = vmatpush1.msra.mxu0 0.0
        %191 = vmatprep.subr.mxu0 0.0
        %192 = vmatpush1.msra.mxu0 0.0
        %193 = vmatprep.subr.mxu0 0.0
        %194 = vmatpush1.msra.mxu0 0.0
        %195 = vmatprep.subr.mxu0 0.0
        %196 = vmatpush1.msra.mxu0 0.0
        %197 = vmatprep.subr.mxu0 0.0
        %198 = vmatpush1.msra.mxu0 0.0
        %199 = vmatprep.subr.mxu0 0.0
        %200 = vmatpush1.msra.mxu0 0.0
        %201 = vmatprep.subr.mxu0 0.0
        %202 = vmatpush1.msra.mxu0 0.0
        %203 = vmatprep.subr.mxu0 0.0
        %204 = vmatpush1.msra.mxu0 0.0
        %205 = vmatprep.subr.mxu0 0.0
        %206 = vmatpush1.msra.mxu0 0.0
        %207 = vmatprep.subr.mxu0 0.0
        %208 = vmatpush1.msra.mxu0 0.0
        %209 = vmatprep.subr.mxu0 0.0
        %210 = vmatpush1.msra.mxu0 0.0
        %211 = vmatprep.subr.mxu0 0.0
        %212 = vmatpush1.msra.mxu0 0.0
        %213 = vmatprep.subr.mxu0 0.0
        %214 = vmatpush1.msra.mxu0 0.0
        %215 = vmatprep.subr.mxu0 0.0
        %216 = vmatpush1.msra.mxu0 0.0
        %217 = vmatprep.subr.mxu0 0.0
        %218 = vmatpush1.msra.mxu0 0.0
        %219 = vmatprep.subr.mxu0 0.0
        %220 = vmatpush1.msra.mxu0 0.0
        %221 = vmatprep.subr.mxu0 0.0
        %222 = vmatpush1.msra.mxu0 0.0
        %223 = vmatprep.subr.mxu0 0.0
        %224 = vmatpush1.msra.mxu0 0.0
        %225 = vmatprep.subr.mxu0 0.0
        %226 = vmatpush1.msra.mxu0 0.0
        %227 = vmatprep.subr.mxu0 0.0
        %228 = vmatpush1.msra.mxu0 0.0
        %229 = vmatprep.subr.mxu0 0.0
        %230 = vmatpush1.msra.mxu0 0.0
        %231 = vmatprep.subr.mxu0 0.0
        %232 = vmatpush1.msra.mxu0 0.0
        %233 = vmatprep.subr.mxu0 0.0
        %234 = vmatpush1.msra.mxu0 0.0
        %235 = vmatprep.subr.mxu0 0.0
        %236 = vmatpush1.msra.mxu0 0.0
        %237 = vmatprep.subr.mxu0 0.0
        %238 = vmatpush1.msra.mxu0 0.0
        %239 = vmatprep.subr.mxu0 0.0
        %240 = vmatpush1.msra.mxu0 0.0
        %241 = vmatprep.subr.mxu0 0.0
        %242 = vmatpush1.msra.mxu0 0.0
        %243 = vmatprep.mubr.f32.mxu0 0.0
        %244 = vmatmul.mubr.f32.gmra.mrb[0].mxu0 %v174
        %v245 = vpop.f32.mrb[0].mxu0
        %v246 = vadd.f32 0.0, %v245
        %v247 = vpop.f32.mrb[0].mxu0
        %v248 = vadd.f32 0.0, %v247
        %249 = vmatprep.mubr.f32.mxu0 0.0
        %250 = vmatmul.mubr.f32.gmra.mrb[0].mxu0 %v177
        %v251 = vpop.f32.mrb[0].mxu0
        %v252 = vadd.f32 0.0, %v251
        %v253 = vpop.f32.mrb[0].mxu0
        %v254 = vadd.f32 0.0, %v253
        %255 = vdwg.mxu0
        %256 = vmatprep.subr.mxu0 %v167
        %257 = vmatpush1.msra.mxu0 %v166
        %258 = vmatprep.subr.mxu0 0.0
        %259 = vmatpush1.msra.mxu0 0.0
        %260 = vmatprep.subr.mxu0 0.0
        %261 = vmatpush1.msra.mxu0 0.0
        %262 = vmatprep.subr.mxu0 0.0
        %263 = vmatpush1.msra.mxu0 0.0
        %264 = vmatprep.subr.mxu0 0.0
        %265 = vmatpush1.msra.mxu0 0.0
        %266 = vmatprep.subr.mxu0 0.0
        %267 = vmatpush1.msra.mxu0 0.0
        %268 = vmatprep.subr.mxu0 0.0
        %269 = vmatpush1.msra.mxu0 0.0
        %270 = vmatprep.subr.mxu0 0.0
        %271 = vmatpush1.msra.mxu0 0.0
        %272 = vmatprep.subr.mxu0 0.0
        %273 = vmatpush1.msra.mxu0 0.0
        %274 = vmatprep.subr.mxu0 0.0
        %275 = vmatpush1.msra.mxu0 0.0
        %276 = vmatprep.subr.mxu0 0.0
        %277 = vmatpush1.msra.mxu0 0.0
        %278 = vmatprep.subr.mxu0 0.0
        %279 = vmatpush1.msra.mxu0 0.0
        %280 = vmatprep.subr.mxu0 0.0
        %281 = vmatpush1.msra.mxu0 0.0
        %282 = vmatprep.subr.mxu0 0.0
        %283 = vmatpush1.msra.mxu0 0.0
        %284 = vmatprep.subr.mxu0 0.0
        %285 = vmatpush1.msra.mxu0 0.0
        %286 = vmatprep.subr.mxu0 0.0
        %287 = vmatpush1.msra.mxu0 0.0
        %288 = vmatprep.subr.mxu0 0.0
        %289 = vmatpush1.msra.mxu0 0.0
        %290 = vmatprep.subr.mxu0 0.0
        %291 = vmatpush1.msra.mxu0 0.0
        %292 = vmatprep.subr.mxu0 0.0
        %293 = vmatpush1.msra.mxu0 0.0
        %294 = vmatprep.subr.mxu0 0.0
        %295 = vmatpush1.msra.mxu0 0.0
        %296 = vmatprep.subr.mxu0 0.0
        %297 = vmatpush1.msra.mxu0 0.0
        %298 = vmatprep.subr.mxu0 0.0
        %299 = vmatpush1.msra.mxu0 0.0
        %300 = vmatprep.subr.mxu0 0.0
        %301 = vmatpush1.msra.mxu0 0.0
        %302 = vmatprep.subr.mxu0 0.0
        %303 = vmatpush1.msra.mxu0 0.0
        %304 = vmatprep.subr.mxu0 0.0
        %305 = vmatpush1.msra.mxu0 0.0
        %306 = vmatprep.subr.mxu0 0.0
        %307 = vmatpush1.msra.mxu0 0.0
        %308 = vmatprep.subr.mxu0 0.0
        %309 = vmatpush1.msra.mxu0 0.0
        %310 = vmatprep.subr.mxu0 0.0
        %311 = vmatpush1.msra.mxu0 0.0
        %312 = vmatprep.subr.mxu0 0.0
        %313 = vmatpush1.msra.mxu0 0.0
        %314 = vmatprep.subr.mxu0 0.0
        %315 = vmatpush1.msra.mxu0 0.0
        %316 = vmatprep.subr.mxu0 0.0
        %317 = vmatpush1.msra.mxu0 0.0
        %318 = vmatprep.subr.mxu0 0.0
        %319 = vmatpush1.msra.mxu0 0.0
        %320 = vmatprep.mubr.f32.mxu0 0.0
        %321 = vmatmul.mubr.f32.gmra.mrb[0].mxu0 %v174
        %v322 = vpop.f32.mrb[0].mxu0
        %v323 = vadd.f32 0.0, %v322
        %v324 = vpop.f32.mrb[0].mxu0
        %v325 = vadd.f32 0.0, %v324
        %326 = vmatprep.mubr.f32.mxu0 0.0
        %327 = vmatmul.mubr.f32.gmra.mrb[0].mxu0 %v177
        %v328 = vpop.f32.mrb[0].mxu0
        %v329 = vadd.f32 0.0, %v328
        %v330 = vpop.f32.mrb[0].mxu0
        %v331 = vadd.f32 0.0, %v330
        %332 = vdwg.mxu0
        %333 = vmatprep.subr.mxu0 %v169
        %334 = vmatpush1.msra.mxu0 %v168
        %335 = vmatprep.subr.mxu0 0.0
        %336 = vmatpush1.msra.mxu0 0.0
        %337 = vmatprep.subr.mxu0 0.0
        %338 = vmatpush1.msra.mxu0 0.0
        %339 = vmatprep.subr.mxu0 0.0
        %340 = vmatpush1.msra.mxu0 0.0
        %341 = vmatprep.subr.mxu0 0.0
        %342 = vmatpush1.msra.mxu0 0.0
        %343 = vmatprep.subr.mxu0 0.0
        %344 = vmatpush1.msra.mxu0 0.0
        %345 = vmatprep.subr.mxu0 0.0
        %346 = vmatpush1.msra.mxu0 0.0
        %347 = vmatprep.subr.mxu0 0.0
        %348 = vmatpush1.msra.mxu0 0.0
        %349 = vmatprep.subr.mxu0 0.0
        %350 = vmatpush1.msra.mxu0 0.0
        %351 = vmatprep.subr.mxu0 0.0
        %352 = vmatpush1.msra.mxu0 0.0
        %353 = vmatprep.subr.mxu0 0.0
        %354 = vmatpush1.msra.mxu0 0.0
        %355 = vmatprep.subr.mxu0 0.0
        %356 = vmatpush1.msra.mxu0 0.0
        %357 = vmatprep.subr.mxu0 0.0
        %358 = vmatpush1.msra.mxu0 0.0
        %359 = vmatprep.subr.mxu0 0.0
        %360 = vmatpush1.msra.mxu0 0.0
        %361 = vmatprep.subr.mxu0 0.0
        %362 = vmatpush1.msra.mxu0 0.0
        %363 = vmatprep.subr.mxu0 0.0
        %364 = vmatpush1.msra.mxu0 0.0
        %365 = vmatprep.subr.mxu0 0.0
        %366 = vmatpush1.msra.mxu0 0.0
        %367 = vmatprep.subr.mxu0 0.0
        %368 = vmatpush1.msra.mxu0 0.0
        %369 = vmatprep.subr.mxu0 0.0
        %370 = vmatpush1.msra.mxu0 0.0
        %371 = vmatprep.subr.mxu0 0.0
        %372 = vmatpush1.msra.mxu0 0.0
        %373 = vmatprep.subr.mxu0 0.0
        %374 = vmatpush1.msra.mxu0 0.0
        %375 = vmatprep.subr.mxu0 0.0
        %376 = vmatpush1.msra.mxu0 0.0
        %377 = vmatprep.subr.mxu0 0.0
        %378 = vmatpush1.msra.mxu0 0.0
        %379 = vmatprep.subr.mxu0 0.0
        %380 = vmatpush1.msra.mxu0 0.0
        %381 = vmatprep.subr.mxu0 0.0
        %382 = vmatpush1.msra.mxu0 0.0
        %383 = vmatprep.subr.mxu0 0.0
        %384 = vmatpush1.msra.mxu0 0.0
        %385 = vmatprep.subr.mxu0 0.0
        %386 = vmatpush1.msra.mxu0 0.0
        %387 = vmatprep.subr.mxu0 0.0
        %388 = vmatpush1.msra.mxu0 0.0
        %389 = vmatprep.subr.mxu0 0.0
        %390 = vmatpush1.msra.mxu0 0.0
        %391 = vmatprep.subr.mxu0 0.0
        %392 = vmatpush1.msra.mxu0 0.0
        %393 = vmatprep.subr.mxu0 0.0
        %394 = vmatpush1.msra.mxu0 0.0
        %395 = vmatprep.subr.mxu0 0.0
        %396 = vmatpush1.msra.mxu0 0.0
        %397 = vmatprep.mubr.f32.mxu0 0.0
        %398 = vmatmul.mubr.f32.gmra.mrb[0].mxu0 %v174
        %v399 = vpop.f32.mrb[0].mxu0
        %v400 = vadd.f32 0.0, %v399
        %v401 = vpop.f32.mrb[0].mxu0
        %v402 = vadd.f32 0.0, %v401
        %403 = vmatprep.mubr.f32.mxu0 0.0
        %404 = vmatmul.mubr.f32.gmra.mrb[0].mxu0 %v177
        %v405 = vpop.f32.mrb[0].mxu0
        %v406 = vadd.f32 0.0, %v405
        %v407 = vpop.f32.mrb[0].mxu0
        %v408 = vadd.f32 0.0, %v407
        %409 = vdwg.mxu0
        %410 = vmatprep.subr.mxu0 %v171
        %411 = vmatpush1.msra.mxu0 %v170
        %412 = vmatprep.subr.mxu0 0.0
        %413 = vmatpush1.msra.mxu0 0.0
        %414 = vmatprep.subr.mxu0 0.0
        %415 = vmatpush1.msra.mxu0 0.0
        %416 = vmatprep.subr.mxu0 0.0
        %417 = vmatpush1.msra.mxu0 0.0
        %418 = vmatprep.subr.mxu0 0.0
        %419 = vmatpush1.msra.mxu0 0.0
        %420 = vmatprep.subr.mxu0 0.0
        %421 = vmatpush1.msra.mxu0 0.0
        %422 = vmatprep.subr.mxu0 0.0
        %423 = vmatpush1.msra.mxu0 0.0
        %424 = vmatprep.subr.mxu0 0.0
        %425 = vmatpush1.msra.mxu0 0.0
        %426 = vmatprep.subr.mxu0 0.0
        %427 = vmatpush1.msra.mxu0 0.0
        %428 = vmatprep.subr.mxu0 0.0
        %429 = vmatpush1.msra.mxu0 0.0
        %430 = vmatprep.subr.mxu0 0.0
        %431 = vmatpush1.msra.mxu0 0.0
        %432 = vmatprep.subr.mxu0 0.0
        %433 = vmatpush1.msra.mxu0 0.0
        %434 = vmatprep.subr.mxu0 0.0
        %435 = vmatpush1.msra.mxu0 0.0
        %436 = vmatprep.subr.mxu0 0.0
        %437 = vmatpush1.msra.mxu0 0.0
        %438 = vmatprep.subr.mxu0 0.0
        %439 = vmatpush1.msra.mxu0 0.0
        %440 = vmatprep.subr.mxu0 0.0
        %441 = vmatpush1.msra.mxu0 0.0
        %442 = vmatprep.subr.mxu0 0.0
        %443 = vmatpush1.msra.mxu0 0.0
        %444 = vmatprep.subr.mxu0 0.0
        %445 = vmatpush1.msra.mxu0 0.0
        %446 = vmatprep.subr.mxu0 0.0
        %447 = vmatpush1.msra.mxu0 0.0
        %448 = vmatprep.subr.mxu0 0.0
        %449 = vmatpush1.msra.mxu0 0.0
        %450 = vmatprep.subr.mxu0 0.0
        %451 = vmatpush1.msra.mxu0 0.0
        %452 = vmatprep.subr.mxu0 0.0
        %453 = vmatpush1.msra.mxu0 0.0
        %454 = vmatprep.subr.mxu0 0.0
        %455 = vmatpush1.msra.mxu0 0.0
        %456 = vmatprep.subr.mxu0 0.0
        %457 = vmatpush1.msra.mxu0 0.0
        %458 = vmatprep.subr.mxu0 0.0
        %459 = vmatpush1.msra.mxu0 0.0
        %460 = vmatprep.subr.mxu0 0.0
        %461 = vmatpush1.msra.mxu0 0.0
        %462 = vmatprep.subr.mxu0 0.0
        %463 = vmatpush1.msra.mxu0 0.0
        %464 = vmatprep.subr.mxu0 0.0
        %465 = vmatpush1.msra.mxu0 0.0
        %466 = vmatprep.subr.mxu0 0.0
        %467 = vmatpush1.msra.mxu0 0.0
        %468 = vmatprep.subr.mxu0 0.0
        %469 = vmatpush1.msra.mxu0 0.0
        %470 = vmatprep.subr.mxu0 0.0
        %471 = vmatpush1.msra.mxu0 0.0
        %472 = vmatprep.subr.mxu0 0.0
        %473 = vmatpush1.msra.mxu0 0.0
        %474 = vmatprep.mubr.f32.mxu0 0.0
        %475 = vmatmul.mubr.f32.gmra.mrb[0].mxu0 %v174
        %v476 = vpop.f32.mrb[0].mxu0
        %v477 = vadd.f32 0.0, %v476
        %v478 = vpop.f32.mrb[0].mxu0
        %v479 = vadd.f32 0.0, %v478
        %480 = vmatprep.mubr.f32.mxu0 0.0
        %481 = vmatmul.mubr.f32.gmra.mrb[0].mxu0 %v177
        %v482 = vpop.f32.mrb[0].mxu0
        %v483 = vadd.f32 0.0, %v482
        %v484 = vpop.f32.mrb[0].mxu0
        %v485 = vadd.f32 0.0, %v484
        %486 = vdwg.mxu0
        %487 = vst [vmem:[%s159] sm:$0xff] %v246
        %488 = vst [vmem:[%s159 + $0x8] sm:$0xff] %v248
        %489 = vst [vmem:[%s159 + $0x10] sm:$0xff] %v323
        %490 = vst [vmem:[%s159 + $0x18] sm:$0xff] %v325
        %491 = vst [vmem:[%s159 + $0x20] sm:$0xff] %v400
        %492 = vst [vmem:[%s159 + $0x28] sm:$0xff] %v402
        %493 = vst [vmem:[%s159 + $0x30] sm:$0xff] %v477
        %494 = vst [vmem:[%s159 + $0x38] sm:$0xff] %v479
        %495 = vst [vmem:[%s159 + $0x40] sm:$0xff] %v252
        %496 = vst [vmem:[%s159 + $0x48] sm:$0xff] %v254
        %497 = vst [vmem:[%s159 + $0x50] sm:$0xff] %v329
        %498 = vst [vmem:[%s159 + $0x58] sm:$0xff] %v331
        %499 = vst [vmem:[%s159 + $0x60] sm:$0xff] %v406
        %500 = vst [vmem:[%s159 + $0x68] sm:$0xff] %v408
        %501 = vst [vmem:[%s159 + $0x70] sm:$0xff] %v483
        %502 = vst [vmem:[%s159 + $0x78] sm:$0xff] %v485
        %s503 = sand.u32 %s74, 1
        %s504 = scalar_lea.sflag [#allocation4], %s503
        %s505 = sand.u32 %s74, 1
        %s506 = smul.addr %s505, 128
        %s507 = scalar_lea.vmem [#allocation5], %s506
        // Predicated region
        $region33: #{tpu_custom_call.1} parent=27 // pred_check
          %p508 = pneg %p84
        $region34: #{tpu_custom_call.1} parent=27 // pred_check_branch
          %510 = sbr.rel (%p508) target = $region36
        $region35: #{tpu_custom_call.1} parent=27 // pred_region
          %s511 = smul.u32 8, %s19
          %s513 = ssub.s32 2048, 2048
          %514 = vsyncadd %s504, %s513
          %s515 = smul.addr %s511, 128
          %s516 = scalar_lea.hbm %s2, %s515
          %s517 = sshll.u32 %s507, 4
          %s518 = int_to_ptr.vmem [resolvable:$true] %s517
          %523 = dma.vmem_to_hbm [thread:$0]  %s518, 2048, %s516, %s504, 1024, 2048, 64
        $region36: #{tpu_custom_call.1} parent=27 // pred_fallthru
          _
      $region28: #{tpu_custom_call.1} parent=5 // pred_fallthru
        _
      %p524 = scmp.le.s32.totalorder 2, %s14
      // Predicated region
      $region37: #{tpu_custom_call.1} parent=5 // pred_check
        %p525 = pneg %p524
      $region38: #{tpu_custom_call.1} parent=5 // pred_check_branch
        %527 = sbr.rel (%p525) target = $region40
      $region39: #{tpu_custom_call.1} parent=5 // pred_region
        %s528 = ssub.s32 %s14, 2
        // Predicated region
        $region41: #{tpu_custom_call.1} parent=39 // pred_check
          %p529 = pneg %p90
        $region42: #{tpu_custom_call.1} parent=39 // pred_check_branch
          %531 = sbr.rel (%p529) target = $region44
        $region43: #{tpu_custom_call.1} parent=39 // pred_region
          %s532 = sand.u32 %s75, 1
          %s533 = scalar_lea.sflag [#allocation4], %s532
          %s534 = sand.u32 %s75, 1
          %s535 = smul.addr %s534, 128
          %s536 = scalar_lea.vmem [#allocation5], %s535
          %537 = dma.done %s533, 2048
        $region44: #{tpu_custom_call.1} parent=39 // pred_fallthru
          _
      $region40: #{tpu_custom_call.1} parent=5 // pred_fallthru
        _
    $region6: #{tpu_custom_call.1} parent=1 // loop_footer
      %s18 = sadd.s32 1, %s14
    $region7: #{tpu_custom_call.1} parent=1 // loop_footer_branch
      %13 = sbr.rel target = $region3
    $region8: #{tpu_custom_call.1} parent=1 // loop_exit
      _
    %538 = vsyncpa [#allocation3], 1
    %s539 = scalar_lea.sflag [#allocation3], 1
    %540 = vsyncpa %s539, 1
    %541 = vsyncpa [#allocation4], 1
    %s542 = scalar_lea.sflag [#allocation4], 1
    %543 = vsyncpa %s542, 1

</llo_original>
